<compile_context>
chip_gen: v7x
topology: tpu7x:2x2x1
jax: 0.10.0
libtpu: 0.0.40
codegen_flags: <defaults>
</compile_context>

<pallas_src>
import functools
import numpy as np
import jax
import jax.numpy as jnp
from jax.experimental import pallas as pl
from jax.experimental.pallas import tpu as pltpu

# ---------------- configuration (small synthetic shapes) ----------------
MAX_SIGNAL_LENGTH = 2560
HOP_LENGTH = 256
NFFT = 256
N_FREQS = NFFT // 2 + 1          # 129
FREQ_PAD = 256                   # N_FREQS padded up to a 128-lane multiple
N_MELS = 16
MEL_PAD = 128                    # lane-dense mel output width (sliced to N_MELS in glue)
SAMPLE_RATE = 24000
HEAD_DIM = 64
HIDDEN_SIZE = 48                 # kept for parity with the torch __init__ (unused in forward)
TEXT_DIM = 32                    # width of f5_text_embed output
TEXT_FF = 2 * TEXT_DIM
VOCAB = 64
TARGET_RMS = 0.1
INV_INT16 = 1.0 / 32768.0


def _round_up(x, m):
    return (x + m - 1) // m * m


# ---------------- kernel A: RMS scale (scalar) from raw int16 audio ----------------
def _rms_scale_kernel(a_ref, o_ref):
    a = a_ref[...].astype(jnp.float32) * INV_INT16          # audio.float() * (1/32768)
    ms = jnp.mean(a * a)                                     # mean(square(audio))
    # target_rms / sqrt(ms); rsqrt(+eps) guards silence and uses the EUP slot
    o_ref[...] = jnp.full((1, 1), TARGET_RMS, jnp.float32) * jax.lax.rsqrt(ms + 1e-12)


def rms_scale(audio_i16_2d):
    return pl.pallas_call(
        _rms_scale_kernel,
        out_shape=jax.ShapeDtypeStruct((1, 1), jnp.float32),
    )(audio_i16_2d)


# ------- kernel B: fused windowed DFT + magnitude + mel projection + log -------
def _mel_kernel(frames_ref, wbasis_ref, fbank_ref, scale_ref, o_ref, *, ref_len, tile):
    # int16 frames -> f32, with the 1/32768 factor and the RMS scale folded in (VALU filler)
    fr = frames_ref[...].astype(jnp.float32) * (scale_ref[...] * INV_INT16)   # (tile, NFFT)
    # single fused DFT matmul: [win*cos | pad | -win*sin | pad] -> (tile, 2*FREQ_PAD)
    res = jnp.dot(fr, wbasis_ref[...], preferred_element_type=jnp.float32)
    real = res[:, :FREQ_PAD]                                 # 128-aligned static slices
    imag = res[:, FREQ_PAD:]
    mag = jnp.sqrt(real * real + imag * imag)                # (tile, FREQ_PAD)
    mel = jnp.dot(mag, fbank_ref[...], preferred_element_type=jnp.float32)    # (tile, 128)
    logmel = jnp.log(jnp.maximum(mel, 1e-5))
    # rows beyond the real signal length are exact zeros (replaces XLA slice + re-pad)
    row = jax.lax.broadcasted_iota(jnp.int32, (tile, MEL_PAD), 0) + pl.program_id(0) * tile
    o_ref[...] = jnp.where(row < ref_len, logmel, 0.0)


def mel_spectrogram(frames_i16, scale, wbasis, fbank_pad, ref_len, tile):
    t_pad = frames_i16.shape[0]
    kernel = functools.partial(_mel_kernel, ref_len=ref_len, tile=tile)
    return pl.pallas_call(
        kernel,
        out_shape=jax.ShapeDtypeStruct((t_pad, MEL_PAD), jnp.float32),
        grid=(t_pad // tile,),
        in_specs=[
            pl.BlockSpec((tile, NFFT), lambda i: (i, 0)),
            pl.BlockSpec((NFFT, 2 * FREQ_PAD), lambda i: (0, 0)),
            pl.BlockSpec((FREQ_PAD, MEL_PAD), lambda i: (0, 0)),
            pl.BlockSpec((1, 1), lambda i: (0, 0)),
        ],
        out_specs=pl.BlockSpec((tile, MEL_PAD), lambda i: (i, 0)),
        compiler_params=pltpu.CompilerParams(dimension_semantics=("parallel",)),
    )(frames_i16, wbasis, fbank_pad, scale)


# ---------- kernel C: text-embedding ConvNeXtV2 block (batched over {real, drop}) ----------
def _text_convnext_kernel(x_ref, pos_ref, dww_ref, dwb_ref, lng_ref, lnb_ref,
                          w1_ref, b1_ref, grng_ref, grnb_ref, w2_ref, b2_ref, o_ref):
    T, D = x_ref.shape
    x = x_ref[...] + pos_ref[...]                    # token embedding + sin/cos position embedding

    # depthwise conv1d (kernel=7, 'same' zero padding): value-space zero-concat + static slices
    # (no VMEM scratch, no unaligned ref-level dynamic slices)
    zpad = jnp.zeros((3, D), jnp.float32)
    xpad = jnp.concatenate([zpad, x, zpad], axis=0)  # (T+6, D)
    dww = dww_ref[...]
    acc = jnp.zeros((T, D), jnp.float32)
    for k in range(7):
        acc = acc + jax.lax.slice(xpad, (k, 0), (k + T, D)) * dww[k:k + 1, :]
    y = acc + dwb_ref[...]

    # LayerNorm(eps=1e-6)
    mu = jnp.mean(y, axis=-1, keepdims=True)
    var = jnp.mean(jnp.square(y - mu), axis=-1, keepdims=True)
    y = (y - mu) * jax.lax.rsqrt(var + 1e-6) * lng_ref[...] + lnb_ref[...]

    # pointwise conv 1 + GELU
    # TODO(synk): torch nn.GELU() is exact erf; tanh approximation used here.
    h = jnp.dot(y, w1_ref[...], preferred_element_type=jnp.float32) + b1_ref[...]
    h = jax.nn.gelu(h, approximate=True)

    # GRN (global response normalization over the time axis, per batch element)
    gx = jnp.sqrt(jnp.sum(h * h, axis=0, keepdims=True))          # (1, TEXT_FF)
    nx = gx / (jnp.mean(gx, axis=-1, keepdims=True) + 1e-6)
    h = grng_ref[...] * (h * nx) + grnb_ref[...] + h

    # pointwise conv 2 + residual
    out = jnp.dot(h, w2_ref[...], preferred_element_type=jnp.float32) + b2_ref[...]
    o_ref[...] = x + out


def text_embed_batched(ids_b, p, seq_len):
    """ids_b: (2, seq_len) int32 — row 0 = real ids(+1, zero padded), row 1 = dropped (zeros)."""
    emb = jnp.take(p["embed_table"], ids_b, axis=0)               # (2, seq_len, TEXT_DIM) glue gather
    pos = p["pos_embed"][:seq_len]                                # (seq_len, TEXT_DIM)
    full = lambda b: (0, 0)
    return pl.pallas_call(
        _text_convnext_kernel,
        out_shape=jax.ShapeDtypeStruct((2, seq_len, TEXT_DIM), jnp.float32),
        grid=(2,),
        in_specs=[
            pl.BlockSpec((None, seq_len, TEXT_DIM), lambda b: (b, 0, 0)),
            pl.BlockSpec((seq_len, TEXT_DIM), full),
            pl.BlockSpec((7, TEXT_DIM), full),
            pl.BlockSpec((1, TEXT_DIM), full),
            pl.BlockSpec((1, TEXT_DIM), full),
            pl.BlockSpec((1, TEXT_DIM), full),
            pl.BlockSpec((TEXT_DIM, TEXT_FF), full),
            pl.BlockSpec((1, TEXT_FF), full),
            pl.BlockSpec((1, TEXT_FF), full),
            pl.BlockSpec((1, TEXT_FF), full),
            pl.BlockSpec((TEXT_FF, TEXT_DIM), full),
            pl.BlockSpec((1, TEXT_DIM), full),
        ],
        out_specs=pl.BlockSpec((None, seq_len, TEXT_DIM), lambda b: (b, 0, 0)),
        compiler_params=pltpu.CompilerParams(dimension_semantics=("parallel",)),
    )(emb, pos, p["dw_w"], p["dw_b"], p["ln_g"], p["ln_b"],
      p["w1"], p["b1"], p["grn_g"], p["grn_b"], p["w2"], p["b2"])


# ---------------- deterministic parameter construction ----------------
def init_params():
    # STFT basis: periodic Hann window * DFT (real / -imag), fused + lane-padded
    n = np.arange(NFFT)
    window = 0.5 - 0.5 * np.cos(2.0 * np.pi * n / NFFT)
    k = np.arange(N_FREQS)
    ang = 2.0 * np.pi * np.outer(n, k) / NFFT
    wcos = (window[:, None] * np.cos(ang)).astype(np.float32)     # (NFFT, N_FREQS)
    wsin = (-window[:, None] * np.sin(ang)).astype(np.float32)
    wbasis = np.zeros((NFFT, 2 * FREQ_PAD), np.float32)
    wbasis[:, :N_FREQS] = wcos
    wbasis[:, FREQ_PAD:FREQ_PAD + N_FREQS] = wsin

    # torchaudio.functional.melscale_fbanks(N_FREQS, 20, 12000, N_MELS, SR, None, 'htk')
    all_freqs = np.linspace(0, SAMPLE_RATE // 2, N_FREQS)
    hz2mel = lambda f: 2595.0 * np.log10(1.0 + f / 700.0)
    mel2hz = lambda m: 700.0 * (10.0 ** (m / 2595.0) - 1.0)
    m_pts = np.linspace(hz2mel(20.0), hz2mel(12000.0), N_MELS + 2)
    f_pts = mel2hz(m_pts)
    f_diff = f_pts[1:] - f_pts[:-1]
    slopes = f_pts[None, :] - all_freqs[:, None]
    down = -slopes[:, :-2] / f_diff[:-1]
    up = slopes[:, 2:] / f_diff[1:]
    fbank_t = np.clip(np.minimum(down, up), 0.0, None).astype(np.float32)   # (N_FREQS, N_MELS)
    fbank_pad = np.zeros((FREQ_PAD, MEL_PAD), np.float32)                   # lane-dense output
    fbank_pad[:N_FREQS, :N_MELS] = fbank_t

    # rope tables (computed exactly as in __init__, stored fp16 then .float() in forward)
    inv_freq = 1.0 / (10000.0 ** (np.arange(0, HEAD_DIM, 2, dtype=np.float32) / HEAD_DIM))
    freqs = np.outer(np.arange(MAX_SIGNAL_LENGTH, dtype=np.float32), inv_freq)
    freqs = np.repeat(freqs, 2, axis=-1)[None]                     # repeat_interleave(2, -1)
    rope_cos = np.cos(freqs).astype(np.float16)
    rope_sin = np.sin(freqs).astype(np.float16)

    # sinusoidal absolute position embedding for text_embed ([cos || sin])
    half = TEXT_DIM // 2
    pinv = 1.0 / (10000.0 ** (np.arange(half, dtype=np.float32) / half))
    pf = np.outer(np.arange(MAX_SIGNAL_LENGTH, dtype=np.float32), pinv)
    pos_embed = np.concatenate([np.cos(pf), np.sin(pf)], axis=-1).astype(np.float32)

    # synthetic, deterministic text_embed weights (checkpoint weights are not loaded)
    ks = jax.random.split(jax.random.PRNGKey(0), 5)
    return dict(
        wbasis=jnp.asarray(wbasis), fbank_pad=jnp.asarray(fbank_pad),
        rope_cos=jnp.asarray(rope_cos), rope_sin=jnp.asarray(rope_sin),
        pos_embed=jnp.asarray(pos_embed),
        embed_table=0.02 * jax.random.normal(ks[0], (VOCAB + 1, TEXT_DIM), jnp.float32),
        dw_w=0.1 * jax.random.normal(ks[1], (7, TEXT_DIM), jnp.float32),
        dw_b=jnp.zeros((1, TEXT_DIM), jnp.float32),
        ln_g=jnp.ones((1, TEXT_DIM), jnp.float32),
        ln_b=jnp.zeros((1, TEXT_DIM), jnp.float32),
        w1=0.05 * jax.random.normal(ks[2], (TEXT_DIM, TEXT_FF), jnp.float32),
        b1=jnp.zeros((1, TEXT_FF), jnp.float32),
        grn_g=0.01 * jax.random.normal(ks[3], (1, TEXT_FF), jnp.float32),
        grn_b=jnp.zeros((1, TEXT_FF), jnp.float32),
        w2=0.05 * jax.random.normal(ks[4], (TEXT_FF, TEXT_DIM), jnp.float32),
        b2=jnp.zeros((1, TEXT_DIM), jnp.float32),
    )


# ---------------- F5Preprocess.forward equivalent ----------------
def f5_preprocess(audio_i16, text_ids, max_duration, params, noise_key):
    """audio_i16: (1,1,L) int16, text_ids: (1,Lt) int32, max_duration: static python int."""
    L = audio_i16.shape[-1]
    ref_signal_len = L // HOP_LENGTH + 1
    assert max_duration >= ref_signal_len and max_duration >= text_ids.shape[-1]

    # kernel A: scalar RMS scale from the raw int16 samples (no normalized-audio HBM copy)
    audio_2d = (audio_i16.reshape(L // 128, 128) if L % 128 == 0 else audio_i16.reshape(1, L))
    scale = rms_scale(audio_2d)                                    # (1,1) f32

    # centered STFT framing with reflect padding on the raw int16 samples (glue gather)
    half = NFFT // 2
    padded = jnp.pad(audio_i16.reshape(L), (half, half), mode="reflect")
    idx = np.arange(ref_signal_len)[:, None] * HOP_LENGTH + np.arange(NFFT)[None, :]
    frames = padded[idx]                                           # (ref_len, NFFT) int16

    tile = 256 if max_duration > 256 else _round_up(max_duration, 8)
    t_pad = _round_up(max_duration, tile)
    frames = jnp.pad(frames, ((0, t_pad - ref_signal_len), (0, 0)))
    mel_out = mel_spectrogram(frames, scale, params["wbasis"], params["fbank_pad"],
                              ref_signal_len, tile)                # kernel B -> (t_pad, 128)
    mel_padded = mel_out[:max_duration, :N_MELS][None]             # (1, max_duration, N_MELS)

    noise = jax.random.normal(noise_key, (1, max_duration, N_MELS), dtype=jnp.float32)
    rope_cos = params["rope_cos"][:, :max_duration].astype(jnp.float32)
    rope_sin = params["rope_sin"][:, :max_duration].astype(jnp.float32)

    # kernel C: real text embedding and "dropped" (all-zero ids) embedding in ONE launch
    pad_ids = jnp.zeros((1, max_duration - text_ids.shape[-1]), jnp.int32)
    ids_real = jnp.concatenate([text_ids.astype(jnp.int32) + 1, pad_ids], axis=-1)
    ids_drop = jnp.zeros((1, max_duration), jnp.int32)
    ids_b = jnp.concatenate([ids_real, ids_drop], axis=0)          # (2, max_duration)
    text_b = text_embed_batched(ids_b, params, max_duration)       # (2, max_duration, TEXT_DIM)
    text_e, drop_e = text_b[0:1], text_b[1:2]

    cat_mel_text = jnp.concatenate([mel_padded, text_e], axis=-1)
    cat_mel_text_drop = jnp.concatenate(
        [jnp.zeros((1, max_duration, N_MELS), jnp.float32), drop_e], axis=-1)

    qk_rotated_empty = jnp.zeros((2, max_duration, HEAD_DIM), jnp.float32)
    return (noise, rope_cos, rope_sin, cat_mel_text, cat_mel_text_drop,
            qk_rotated_empty, jnp.asarray(ref_signal_len, jnp.int32))


if __name__ == "__main__":
    params = init_params()
    key = jax.random.PRNGKey(0)
    k_audio, k_text, k_noise = jax.random.split(key, 3)

    L = 16 * HOP_LENGTH                                            # 4096 samples -> 17 mel frames
    audio = jax.random.randint(k_audio, (1, 1, L), -20000, 20000, dtype=jnp.int32).astype(jnp.int16)
    text_ids = jax.random.randint(k_text, (1, 12), 0, VOCAB, dtype=jnp.int32)
    max_duration = 40                                              # static (>= ref frames, >= text len)

    outs = jax.block_until_ready(f5_preprocess(audio, text_ids, max_duration, params, k_noise))
    noise, rope_cos, rope_sin, cat_mel_text, cat_mel_text_drop, qk_empty, ref_len = outs

    assert noise.shape == (1, max_duration, N_MELS)
    assert rope_cos.shape == (1, max_duration, HEAD_DIM)
    assert rope_sin.shape == (1, max_duration, HEAD_DIM)
    assert cat_mel_text.shape == (1, max_duration, N_MELS + TEXT_DIM)
    assert cat_mel_text_drop.shape == (1, max_duration, N_MELS + TEXT_DIM)
    assert qk_empty.shape == (2, max_duration, HEAD_DIM)
    assert int(ref_len) == L // HOP_LENGTH + 1
    assert bool(jnp.all(jnp.isfinite(cat_mel_text)))
    assert bool(jnp.all(jnp.isfinite(cat_mel_text_drop)))
    # rows at/after ref_signal_len must be exact zeros in the mel part (matches torch zero-pad)
    assert bool(jnp.all(cat_mel_text[0, int(ref_len):, :N_MELS] == 0.0))
    print("KERNEL_OK")
</pallas_src>

<mosaic_0001>
module attributes {stable_mosaic.version = 11 : i64} {
  func.func @_rms_scale_kernel(%arg0: memref<32x128xi16, #tpu.memory_space<vmem>>, %arg1: memref<1x1xf32, #tpu.memory_space<vmem>>) attributes {dimension_semantics = [], scalar_prefetch = 0 : i64, scratch_operands = 0 : i64, tpu.core_type = #tpu.core_type<tc>} {
    %c0 = arith.constant 0 : index
    %c0_0 = arith.constant 0 : index
    %0 = vector.load %arg0[%c0, %c0_0] : memref<32x128xi16, #tpu.memory_space<vmem>>, vector<32x128xi16>
    %1 = arith.sitofp %0 : vector<32x128xi16> to vector<32x128xf32>
    %cst = arith.constant 3.05175781E-5 : f32
    %2 = vector.broadcast %cst : f32 to vector<32x128xf32>
    %3 = arith.mulf %1, %2 : vector<32x128xf32>
    %4 = arith.mulf %3, %3 : vector<32x128xf32>
    %5 = vector.shape_cast %4 : vector<32x128xf32> to vector<1x32x128xf32>
    %cst_1 = arith.constant dense<0.000000e+00> : vector<1xf32>
    %6 = vector.multi_reduction <add>, %5, %cst_1 [1, 2] : vector<1x32x128xf32> to vector<1xf32>
    %7 = vector.shape_cast %6 : vector<1xf32> to vector<1x1x1xf32>
    %8 = vector.extract %7[0, 0, 0] : f32 from vector<1x1x1xf32>
    %cst_2 = arith.constant 4.096000e+03 : f32
    %9 = arith.divf %8, %cst_2 : f32
    %cst_3 = arith.constant 1.000000e-01 : f32
    %10 = vector.broadcast %cst_3 : f32 to vector<1x1xf32>
    %cst_4 = arith.constant 9.99999996E-13 : f32
    %11 = arith.addf %9, %cst_4 : f32
    %12 = math.rsqrt %11 : f32
    %13 = vector.broadcast %12 : f32 to vector<1x1xf32>
    %14 = arith.mulf %10, %13 : vector<1x1xf32>
    %c0_5 = arith.constant 0 : index
    %c0_6 = arith.constant 0 : index
    %15 = vector.load %arg1[%c0_5, %c0_6] : memref<1x1xf32, #tpu.memory_space<vmem>>, vector<1x1xf32>
    tpu.vector_store %arg1[%c0_5, %c0_6], %14 {strides = array<i32>} : memref<1x1xf32, #tpu.memory_space<vmem>>, vector<1x1xf32>,
    return
  }
}

</mosaic_0001>

<llo_original>
// kernel: tpu_custom_call.1
$region0: #{tpu_custom_call.1}
  #allocation0 [shape = 'u32[]', space=smem, size = 0x4, offset = 0x4, fixed_abs, tag = 'smem constant byte address 0x4 - core index']
  #allocation1 [shape = 'u32[144,128]{1,0:T(1,128)}', space=vmem, size = 0x12000, scoped, tag = 'internal scratch']
  %s0 = inlined_call_operand.hbm [shape: s16[32,128], index: 0, kind: input, shape index: {}]
  %s1 = inlined_call_operand.hbm [shape: f32[1,1], index: 1, kind: output, shape index: {}]
  %s2 = sld [smem:[#allocation0]]
  $region18: #{tpu_custom_call.1} parent=0
    _
  %s4 = ssub.s32 1, %s2
  %s5 = scalar_select 0, %s4, %s2
  $region1: #{tpu_custom_call.1} parent=0
    #allocation2 [shape = 'u8[8192]{0}', space=vmem, size = 0x2000, scoped, tag = 'input window, operand 0, single buffered']
    #allocation3 [shape = 's32[1]{0}', space=sflag, size = 0x4, scoped, tag = 'scoped memory for tpu_custom_call.1']
    #allocation4 [shape = 's32[1]{0}', space=sflag, size = 0x4, scoped, tag = 'scoped memory for tpu_custom_call.1']
    #allocation5 [shape = 'u8[512]{0}', space=vmem, size = 0x400, scoped, tag = 'output window, operand 0, single buffered']
    %6 = vsyncpa [#allocation3], 0
    %7 = vsyncpa [#allocation4], 0
    // Predicated region
    $region2: #{tpu_custom_call.1} parent=1 // pred_check
      _
    $region3: #{tpu_custom_call.1} parent=1 // pred_check_branch
      %9 = sbr.rel (0) target = $region5
    $region4: #{tpu_custom_call.1} parent=1 // pred_region
      %s11 = ssub.s32 256, 256
      %12 = vsyncadd [#allocation3], %s11
      %s13 = sshll.u32 [#allocation2], 4
      %s14 = int_to_ptr.vmem [resolvable:$true] %s13
      %19 = dma.hbm_to_vmem [thread:$0]  %s0, 256, %s14, [#allocation3], 64, 64, 4
    $region5: #{tpu_custom_call.1} parent=1 // pred_fallthru
      _
    // Predicated region
    $region6: #{tpu_custom_call.1} parent=1 // pred_check
      _
    $region7: #{tpu_custom_call.1} parent=1 // pred_check_branch
      %21 = sbr.rel (0) target = $region9
    $region8: #{tpu_custom_call.1} parent=1 // pred_region
      %22 = dma.done [#allocation3], 256
    $region9: #{tpu_custom_call.1} parent=1 // pred_fallthru
      _
    %v23 = vld [vmem:[#allocation2] sm:$0xf]
    %v24 = vld [vmem:[#allocation2 + $0x4] sm:$0xf]
    %v25 = vld [vmem:[#allocation2 + $0x8] sm:$0xf]
    %v26 = vld [vmem:[#allocation2 + $0xc] sm:$0xf]
    %v27 = vunpack.c.l.b16 %v23
    %v28 = vunpack.c.l.b16 %v24
    %v29 = vunpack.c.l.b16 %v25
    %v30 = vunpack.c.l.b16 %v26
    %v31 = vcvt.s32.f32 %v27
    %v32 = vcvt.s32.f32 %v28
    %v33 = vcvt.s32.f32 %v29
    %v34 = vcvt.s32.f32 %v30
    %v35 = vmul.f32 %v31, 3.0517578e-05
    %v36 = vmul.f32 %v32, 3.0517578e-05
    %v37 = vmul.f32 %v33, 3.0517578e-05
    %v38 = vmul.f32 %v34, 3.0517578e-05
    %v39 = vmul.f32 %v35, %v35
    %v40 = vmul.f32 %v36, %v36
    %v41 = vmul.f32 %v37, %v37
    %v42 = vmul.f32 %v38, %v38
    %v43 = vadd.f32 %v39, %v40
    %v44 = vadd.f32 %v43, %v41
    %v45 = vadd.f32 %v44, %v42
    %46 = vadd.xlane.f32.xlu0 %v45
    %v47 = vpop.xlane.xlu0 %46
    %v48 = vrot.slane %v47, 4
    %v49 = vadd.f32 %v47, %v48
    %v50 = vrot.slane %v49, 2
    %v51 = vadd.f32 %v49, %v50
    %v52 = vrot.slane %v51, 1
    %v53 = vadd.f32 %v51, %v52
    %s54 = vtos %v53
    %v55 = vrcp.pop 4096.0
    %s56 = vtos %v55
    %s57 = smul.f32 %s54, %s56
    %s58 = sadd.f32 %s57, 1e-12
    %v59 = vstv %s58
    %v60 = vrsqrt.pop %v59
    %s61 = vtos %v60
    %v62 = vstv %s61
    %v63 = vmul.f32 %v62, 0.1
    %vm64 = vcmask 0
    %65 = vst.msk [vmem:[#allocation5] sm:$0x1] %vm64, %v63
    // Predicated region
    $region10: #{tpu_custom_call.1} parent=1 // pred_check
      _
    $region11: #{tpu_custom_call.1} parent=1 // pred_check_branch
      %67 = sbr.rel (0) target = $region13
    $region12: #{tpu_custom_call.1} parent=1 // pred_region
      %s69 = ssub.s32 16, 16
      %70 = vsyncadd [#allocation4], %s69
      %s72 = sshll.u32 [#allocation5], 4
      %s73 = int_to_ptr.vmem [resolvable:$true] %s72
      %75 = dma.vmem_to_hbm [thread:$0]  %s73, 16, %s1, [#allocation4]
    $region13: #{tpu_custom_call.1} parent=1 // pred_fallthru
      _
    // Predicated region
    $region14: #{tpu_custom_call.1} parent=1 // pred_check
      _
    $region15: #{tpu_custom_call.1} parent=1 // pred_check_branch
      %77 = sbr.rel (0) target = $region17
    $region16: #{tpu_custom_call.1} parent=1 // pred_region
      %78 = dma.done [#allocation4], 16
    $region17: #{tpu_custom_call.1} parent=1 // pred_fallthru
      _
    %79 = vsyncpa [#allocation3], 1
    %80 = vsyncpa [#allocation4], 1

</llo_original>
